<compile_context>
chip_gen: v7x
topology: tpu7x:2x2x1
jax: 0.10.0
libtpu: 0.0.40
codegen_flags: <defaults>
</compile_context>

<pallas_src>
import functools

import jax
import jax.numpy as jnp
from jax.experimental import pallas as pl
from jax.experimental.pallas import tpu as pltpu

_LANE = 128
_SUBLANE = 8


def _round_up(n, m):
    return -(-n // m) * m


def _fused_mlp_kernel(x_ref, *refs, n_layers, residual_mask, activation):
    """Fully fused ResidualMLP forward for one batch tile.

    refs = (w0, b0, w1, b1, ..., w_{L-1}, b_{L-1}, o_ref); all feature dims are
    pre-padded to multiples of 128 lanes.  Intermediates live in vregs/VMEM.
    """
    o_ref = refs[-1]
    wb_refs = refs[:-1]

    x = x_ref[...]
    for i in range(n_layers):
        w = wb_refs[2 * i][...]
        b = wb_refs[2 * i + 1][...]            # (1, F_pad) broadcasts over rows
        y = jnp.dot(x, w, preferred_element_type=jnp.float32) + b
        if residual_mask[i]:                   # PyTorch: x.size() == x_forwarded.size()
            y = x + y
        if i < n_layers - 1:                   # PyTorch: relu if 'relu' else tanh
            y = jnp.maximum(y, 0.0) if activation == "relu" else jnp.tanh(y)
        x = y
    o_ref[...] = x.astype(o_ref.dtype)


def residual_mlp_forward(x, params, activation, *, row_tile=512):
    """Run the fused ResidualMLP forward as one Pallas call.

    x: (B, input_dim)   params[i] = (W_i of shape (in, out), b_i of shape (1, out))
    """
    B, in_dim = x.shape
    dims = [in_dim] + [w.shape[1] for w, _ in params]
    out_dim = dims[-1]
    n_layers = len(params)

    # Residual applies when the layer preserves the feature dim (original dims).
    residual_mask = tuple(dims[i] == dims[i + 1] for i in range(n_layers))

    # Pad every feature dim up to a full 128-lane width (lane-dense layout).
    dims_pad = [_round_up(d, _LANE) for d in dims]

    flat_params = []
    wb_specs = []
    for i, (w, b) in enumerate(params):
        din, dout = dims_pad[i], dims_pad[i + 1]
        w_p = jnp.zeros((din, dout), w.dtype).at[: w.shape[0], : w.shape[1]].set(w)
        b_p = jnp.zeros((1, dout), b.dtype).at[:, : b.shape[-1]].set(b.reshape(1, -1))
        flat_params.extend((w_p, b_p))
        # Same block every grid step -> weights/biases stay VMEM-resident.
        wb_specs.append(pl.BlockSpec((din, dout), lambda i: (0, 0)))
        wb_specs.append(pl.BlockSpec((1, dout), lambda i: (0, 0)))

    # Batch tile: biggest tile that covers the batch (up to row_tile);
    # tiny batches round up to an 8-sublane vreg.
    tm = min(row_tile, _round_up(B, _SUBLANE))
    B_pad = _round_up(B, tm)
    in_pad = dims_pad[0]
    x_p = jnp.zeros((B_pad, in_pad), x.dtype).at[:B, :in_dim].set(x)

    kernel = functools.partial(
        _fused_mlp_kernel, n_layers=n_layers,
        residual_mask=residual_mask, activation=activation)

    out = pl.pallas_call(
        kernel,
        out_shape=jax.ShapeDtypeStruct((B_pad, dims_pad[-1]), x.dtype),
        grid=(B_pad // tm,),
        in_specs=[pl.BlockSpec((tm, in_pad), lambda i: (i, 0))] + wb_specs,
        out_specs=pl.BlockSpec((tm, dims_pad[-1]), lambda i: (i, 0)),
        compiler_params=pltpu.CompilerParams(
            dimension_semantics=("parallel",)),   # shards batch tiles on v7x's 2 TCs
    )(x_p, *flat_params)
    return out[:B, :out_dim]


def init_residual_mlp_params(key, input_dim, hidden_sizes, output_dim):
    """Deterministic params mimicking PyTorch Linear's U(-1/sqrt(fan_in), ...)."""
    dims = [input_dim] + list(hidden_sizes) + [output_dim]
    params = []
    for i in range(len(dims) - 1):
        fan_in, fan_out = dims[i], dims[i + 1]
        key, kw, kb = jax.random.split(key, 3)
        bound = 1.0 / jnp.sqrt(jnp.float32(fan_in))
        # stored pre-transposed as (in, out) for x @ W on the MXU
        w = jax.random.uniform(kw, (fan_in, fan_out), jnp.float32, -bound, bound)
        b = jax.random.uniform(kb, (1, fan_out), jnp.float32, -bound, bound)
        params.append((w, b))
    return params


def residual_mlp_reference(x, params, activation):
    """Pure-JAX reference mirroring the PyTorch forward (unpadded params)."""
    n_layers = len(params)
    for i, (w, b) in enumerate(params):
        y = x @ w + b[0]
        if x.shape == y.shape:
            y = x + y
        if i < n_layers - 1:
            y = jnp.maximum(y, 0.0) if activation == "relu" else jnp.tanh(y)
        x = y
    return x


if __name__ == "__main__":
    key = jax.random.PRNGKey(0)
    key, kx_small, kx_big = jax.random.split(key, 3)

    # Shapes implied by the module: ResidualMLP(16, [32, 32], 8, activation)
    input_dim, hidden_sizes, output_dim = 16, [32, 32], 8
    params = init_residual_mlp_params(key, input_dim, hidden_sizes, output_dim)

    fwd = jax.jit(residual_mlp_forward, static_argnames=("activation", "row_tile"))

    for activation, kx, batch in (("relu", kx_small, 4), ("tanh", kx_big, 512)):
        x = jax.random.normal(kx, (batch, input_dim), jnp.float32)
        out = jax.block_until_ready(fwd(x, params, activation))
        ref = residual_mlp_reference(x, params, activation)
        assert out.shape == (batch, output_dim)
        assert jnp.allclose(out, ref, atol=1e-5, rtol=1e-5), (
            f"mismatch vs reference (activation={activation}, batch={batch})")

    print("KERNEL_OK")
</pallas_src>

<mosaic_0001>
module attributes {stable_mosaic.version = 11 : i64} {
  func.func @_fused_mlp_kernel(%arg0: i32, %arg1: memref<8x128xf32, #tpu.memory_space<vmem>>, %arg2: memref<128x128xf32, #tpu.memory_space<vmem>>, %arg3: memref<1x128xf32, #tpu.memory_space<vmem>>, %arg4: memref<128x128xf32, #tpu.memory_space<vmem>>, %arg5: memref<1x128xf32, #tpu.memory_space<vmem>>, %arg6: memref<128x128xf32, #tpu.memory_space<vmem>>, %arg7: memref<1x128xf32, #tpu.memory_space<vmem>>, %arg8: memref<8x128xf32, #tpu.memory_space<vmem>>) attributes {dimension_semantics = [#tpu.dimension_semantics<parallel>], iteration_bounds = array<i64: 1>, scalar_prefetch = 0 : i64, scratch_operands = 0 : i64, tpu.core_type = #tpu.core_type<tc>, window_params = [{transform_indices = @transform_0, window_bounds = array<i64: 8, 128>}, {pipeline_mode = #tpu.pipeline_mode<synchronous>, transform_indices = @transform_1, window_bounds = array<i64: 128, 128>}, {pipeline_mode = #tpu.pipeline_mode<synchronous>, transform_indices = @transform_2, window_bounds = array<i64: 1, 128>}, {pipeline_mode = #tpu.pipeline_mode<synchronous>, transform_indices = @transform_3, window_bounds = array<i64: 128, 128>}, {pipeline_mode = #tpu.pipeline_mode<synchronous>, transform_indices = @transform_4, window_bounds = array<i64: 1, 128>}, {pipeline_mode = #tpu.pipeline_mode<synchronous>, transform_indices = @transform_5, window_bounds = array<i64: 128, 128>}, {pipeline_mode = #tpu.pipeline_mode<synchronous>, transform_indices = @transform_6, window_bounds = array<i64: 1, 128>}, {transform_indices = @transform_7, window_bounds = array<i64: 8, 128>}]} {
    %c0 = arith.constant 0 : index
    %c0_0 = arith.constant 0 : index
    %0 = vector.load %arg1[%c0, %c0_0] : memref<8x128xf32, #tpu.memory_space<vmem>>, vector<8x128xf32>
    %c0_1 = arith.constant 0 : index
    %c0_2 = arith.constant 0 : index
    %1 = vector.load %arg2[%c0_1, %c0_2] : memref<128x128xf32, #tpu.memory_space<vmem>>, vector<128x128xf32>
    %c0_3 = arith.constant 0 : index
    %c0_4 = arith.constant 0 : index
    %2 = vector.load %arg3[%c0_3, %c0_4] : memref<1x128xf32, #tpu.memory_space<vmem>>, vector<1x128xf32>
    %cst = arith.constant dense<0.000000e+00> : vector<8x128xf32>
    %3 = tpu.matmul %0, %1, %cst {dimension_numbers = #tpu.dot_dimension_numbers<[1], [0], [0], [1], [0, 0, 1, 1], [], []>} : vector<8x128xf32>, vector<128x128xf32>, vector<8x128xf32> -> vector<8x128xf32>
    %4 = vector.broadcast %2 : vector<1x128xf32> to vector<8x128xf32>
    %5 = arith.addf %3, %4 : vector<8x128xf32>
    %cst_5 = arith.constant 0.000000e+00 : f32
    %6 = vector.broadcast %cst_5 : f32 to vector<8x128xf32>
    %7 = arith.maximumf %5, %6 : vector<8x128xf32>
    %c0_6 = arith.constant 0 : index
    %c0_7 = arith.constant 0 : index
    %8 = vector.load %arg4[%c0_6, %c0_7] : memref<128x128xf32, #tpu.memory_space<vmem>>, vector<128x128xf32>
    %c0_8 = arith.constant 0 : index
    %c0_9 = arith.constant 0 : index
    %9 = vector.load %arg5[%c0_8, %c0_9] : memref<1x128xf32, #tpu.memory_space<vmem>>, vector<1x128xf32>
    %cst_10 = arith.constant dense<0.000000e+00> : vector<8x128xf32>
    %10 = tpu.matmul %7, %8, %cst_10 {dimension_numbers = #tpu.dot_dimension_numbers<[1], [0], [0], [1], [0, 0, 1, 1], [], []>} : vector<8x128xf32>, vector<128x128xf32>, vector<8x128xf32> -> vector<8x128xf32>
    %11 = vector.broadcast %9 : vector<1x128xf32> to vector<8x128xf32>
    %12 = arith.addf %10, %11 : vector<8x128xf32>
    %13 = arith.addf %7, %12 : vector<8x128xf32>
    %cst_11 = arith.constant 0.000000e+00 : f32
    %14 = vector.broadcast %cst_11 : f32 to vector<8x128xf32>
    %15 = arith.maximumf %13, %14 : vector<8x128xf32>
    %c0_12 = arith.constant 0 : index
    %c0_13 = arith.constant 0 : index
    %16 = vector.load %arg6[%c0_12, %c0_13] : memref<128x128xf32, #tpu.memory_space<vmem>>, vector<128x128xf32>
    %c0_14 = arith.constant 0 : index
    %c0_15 = arith.constant 0 : index
    %17 = vector.load %arg7[%c0_14, %c0_15] : memref<1x128xf32, #tpu.memory_space<vmem>>, vector<1x128xf32>
    %cst_16 = arith.constant dense<0.000000e+00> : vector<8x128xf32>
    %18 = tpu.matmul %15, %16, %cst_16 {dimension_numbers = #tpu.dot_dimension_numbers<[1], [0], [0], [1], [0, 0, 1, 1], [], []>} : vector<8x128xf32>, vector<128x128xf32>, vector<8x128xf32> -> vector<8x128xf32>
    %19 = vector.broadcast %17 : vector<1x128xf32> to vector<8x128xf32>
    %20 = arith.addf %18, %19 : vector<8x128xf32>
    %c0_17 = arith.constant 0 : index
    %c0_18 = arith.constant 0 : index
    %21 = vector.load %arg8[%c0_17, %c0_18] : memref<8x128xf32, #tpu.memory_space<vmem>>, vector<8x128xf32>
    tpu.vector_store %arg8[%c0_17, %c0_18], %20 {strides = array<i32>} : memref<8x128xf32, #tpu.memory_space<vmem>>, vector<8x128xf32>,
    return
  }
  func.func @transform_0(%arg0: i32) -> (i32, i32) {
    %c0_i32 = arith.constant 0 : i32
    %c0_i32_0 = arith.constant 0 : i32
    return %arg0, %c0_i32 : i32, i32
  }
  func.func @transform_1(%arg0: i32) -> (i32, i32) {
    %c0_i32 = arith.constant 0 : i32
    %c0_i32_0 = arith.constant 0 : i32
    %c0_i32_1 = arith.constant 0 : i32
    return %c0_i32, %c0_i32_0 : i32, i32
  }
  func.func @transform_2(%arg0: i32) -> (i32, i32) {
    %c0_i32 = arith.constant 0 : i32
    %c0_i32_0 = arith.constant 0 : i32
    %c0_i32_1 = arith.constant 0 : i32
    return %c0_i32, %c0_i32_0 : i32, i32
  }
  func.func @transform_3(%arg0: i32) -> (i32, i32) {
    %c0_i32 = arith.constant 0 : i32
    %c0_i32_0 = arith.constant 0 : i32
    %c0_i32_1 = arith.constant 0 : i32
    return %c0_i32, %c0_i32_0 : i32, i32
  }
  func.func @transform_4(%arg0: i32) -> (i32, i32) {
    %c0_i32 = arith.constant 0 : i32
    %c0_i32_0 = arith.constant 0 : i32
    %c0_i32_1 = arith.constant 0 : i32
    return %c0_i32, %c0_i32_0 : i32, i32
  }
  func.func @transform_5(%arg0: i32) -> (i32, i32) {
    %c0_i32 = arith.constant 0 : i32
    %c0_i32_0 = arith.constant 0 : i32
    %c0_i32_1 = arith.constant 0 : i32
    return %c0_i32, %c0_i32_0 : i32, i32
  }
  func.func @transform_6(%arg0: i32) -> (i32, i32) {
    %c0_i32 = arith.constant 0 : i32
    %c0_i32_0 = arith.constant 0 : i32
    %c0_i32_1 = arith.constant 0 : i32
    return %c0_i32, %c0_i32_0 : i32, i32
  }
  func.func @transform_7(%arg0: i32) -> (i32, i32) {
    %c0_i32 = arith.constant 0 : i32
    %c0_i32_0 = arith.constant 0 : i32
    return %arg0, %c0_i32 : i32, i32
  }
}

</mosaic_0001>

<llo_original>
// kernel: residual_mlp_forward.1
$region0: #{residual_mlp_forward.1}
  #allocation0 [shape = 'u32[]', space=smem, size = 0x4, offset = 0x4, fixed_abs, tag = 'smem constant byte address 0x4 - core index']
  #allocation1 [shape = 'u32[144,128]{1,0:T(1,128)}', space=vmem, size = 0x12000, scoped, tag = 'internal scratch']
  %s0 = inlined_call_operand.vmem [shape: f32[8,128], index: 0, kind: input, shape index: {}]
  %s1 = inlined_call_operand.vmem [shape: f32[128,128], index: 1, kind: input, shape index: {}]
  %s2 = inlined_call_operand.vmem [shape: f32[1,128], index: 2, kind: input, shape index: {}]
  %s3 = inlined_call_operand.vmem [shape: f32[128,128], index: 3, kind: input, shape index: {}]
  %s4 = inlined_call_operand.vmem [shape: f32[1,128], index: 4, kind: input, shape index: {}]
  %s5 = inlined_call_operand.vmem [shape: f32[128,128], index: 5, kind: input, shape index: {}]
  %s6 = inlined_call_operand.vmem [shape: f32[1,128], index: 6, kind: input, shape index: {}]
  %s7 = inlined_call_operand.vmem [shape: f32[8,128], index: 7, kind: output, shape index: {}]
  %s8 = sld [smem:[#allocation0]]
  $region38: #{residual_mlp_forward.1} parent=0
    _
  %s10 = ssub.s32 1, %s8
  %s11 = scalar_select 0, %s10, %s8
  // Predicated region
  $region2: #{residual_mlp_forward.1} parent=0 // pred_check
    _
  $region3: #{residual_mlp_forward.1} parent=0 // pred_check_branch
    %13 = sbr.rel (0) target = $region5
  $region4: #{residual_mlp_forward.1} parent=0 // pred_region
    _
  $region5: #{residual_mlp_forward.1} parent=0 // pred_fallthru
    _
  // Predicated region
  $region6: #{residual_mlp_forward.1} parent=0 // pred_check
    _
  $region7: #{residual_mlp_forward.1} parent=0 // pred_check_branch
    %15 = sbr.rel (0) target = $region9
  $region8: #{residual_mlp_forward.1} parent=0 // pred_region
    _
  $region9: #{residual_mlp_forward.1} parent=0 // pred_fallthru
    _
  // Predicated region
  $region10: #{residual_mlp_forward.1} parent=0 // pred_check
    _
  $region11: #{residual_mlp_forward.1} parent=0 // pred_check_branch
    %17 = sbr.rel (0) target = $region13
  $region12: #{residual_mlp_forward.1} parent=0 // pred_region
    _
  $region13: #{residual_mlp_forward.1} parent=0 // pred_fallthru
    _
  // Predicated region
  $region14: #{residual_mlp_forward.1} parent=0 // pred_check
    _
  $region15: #{residual_mlp_forward.1} parent=0 // pred_check_branch
    %19 = sbr.rel (0) target = $region17
  $region16: #{residual_mlp_forward.1} parent=0 // pred_region
    _
  $region17: #{residual_mlp_forward.1} parent=0 // pred_fallthru
    _
  // Predicated region
  $region18: #{residual_mlp_forward.1} parent=0 // pred_check
    _
  $region19: #{residual_mlp_forward.1} parent=0 // pred_check_branch
    %21 = sbr.rel (0) target = $region21
  $region20: #{residual_mlp_forward.1} parent=0 // pred_region
    _
  $region21: #{residual_mlp_forward.1} parent=0 // pred_fallthru
    _
  // Predicated region
  $region22: #{residual_mlp_forward.1} parent=0 // pred_check
    _
  $region23: #{residual_mlp_forward.1} parent=0 // pred_check_branch
    %23 = sbr.rel (0) target = $region25
  $region24: #{residual_mlp_forward.1} parent=0 // pred_region
    _
  $region25: #{residual_mlp_forward.1} parent=0 // pred_fallthru
    _
  // Predicated region
  $region26: #{residual_mlp_forward.1} parent=0 // pred_check
    _
  $region27: #{residual_mlp_forward.1} parent=0 // pred_check_branch
    %25 = sbr.rel (0) target = $region29
  $region28: #{residual_mlp_forward.1} parent=0 // pred_region
    _
  $region29: #{residual_mlp_forward.1} parent=0 // pred_fallthru
    _
  %v26 = vld [vmem:[%s0] sm:$0xff]
  %v27 = vld [vmem:[%s1] sm:$0xff]
  %v28 = vld [vmem:[%s1 + $0x8] sm:$0xff]
  %v29 = vld [vmem:[%s1 + $0x10] sm:$0xff]
  %v30 = vld [vmem:[%s1 + $0x18] sm:$0xff]
  %v31 = vld [vmem:[%s1 + $0x20] sm:$0xff]
  %v32 = vld [vmem:[%s1 + $0x28] sm:$0xff]
  %v33 = vld [vmem:[%s1 + $0x30] sm:$0xff]
  %v34 = vld [vmem:[%s1 + $0x38] sm:$0xff]
  %v35 = vld [vmem:[%s1 + $0x40] sm:$0xff]
  %v36 = vld [vmem:[%s1 + $0x48] sm:$0xff]
  %v37 = vld [vmem:[%s1 + $0x50] sm:$0xff]
  %v38 = vld [vmem:[%s1 + $0x58] sm:$0xff]
  %v39 = vld [vmem:[%s1 + $0x60] sm:$0xff]
  %v40 = vld [vmem:[%s1 + $0x68] sm:$0xff]
  %v41 = vld [vmem:[%s1 + $0x70] sm:$0xff]
  %v42 = vld [vmem:[%s1 + $0x78] sm:$0xff]
  %v43 = vld [vmem:[%s2] sm:$0x1]
  %v45 = vlaneseq
  %v46 = vshrl.u32 %v45, 7
  %v47 = vsub.s32 0, %v46
  %v48 = vrot.slane %v43, %v47
  %50 = vmatprep.subr.mxu0 0.0
  %51 = vmatpush1.msra.mxu0 %v27
  %52 = vmatprep.subr.mxu0 0.0
  %53 = vmatpush1.msra.mxu0 %v28
  %54 = vmatprep.subr.mxu0 0.0
  %55 = vmatpush1.msra.mxu0 %v29
  %56 = vmatprep.subr.mxu0 0.0
  %57 = vmatpush1.msra.mxu0 %v30
  %58 = vmatprep.subr.mxu0 0.0
  %59 = vmatpush1.msra.mxu0 %v31
  %60 = vmatprep.subr.mxu0 0.0
  %61 = vmatpush1.msra.mxu0 %v32
  %62 = vmatprep.subr.mxu0 0.0
  %63 = vmatpush1.msra.mxu0 %v33
  %64 = vmatprep.subr.mxu0 0.0
  %65 = vmatpush1.msra.mxu0 %v34
  %66 = vmatprep.subr.mxu0 0.0
  %67 = vmatpush1.msra.mxu0 %v35
  %68 = vmatprep.subr.mxu0 0.0
  %69 = vmatpush1.msra.mxu0 %v36
  %70 = vmatprep.subr.mxu0 0.0
  %71 = vmatpush1.msra.mxu0 %v37
  %72 = vmatprep.subr.mxu0 0.0
  %73 = vmatpush1.msra.mxu0 %v38
  %74 = vmatprep.subr.mxu0 0.0
  %75 = vmatpush1.msra.mxu0 %v39
  %76 = vmatprep.subr.mxu0 0.0
  %77 = vmatpush1.msra.mxu0 %v40
  %78 = vmatprep.subr.mxu0 0.0
  %79 = vmatpush1.msra.mxu0 %v41
  %80 = vmatprep.subr.mxu0 0.0
  %81 = vmatpush1.msra.mxu0 %v42
  %82 = vmatprep.subr.mxu0 0.0
  %83 = vmatpush1.msra.mxu0 0.0
  %84 = vmatprep.subr.mxu0 0.0
  %85 = vmatpush1.msra.mxu0 0.0
  %86 = vmatprep.subr.mxu0 0.0
  %87 = vmatpush1.msra.mxu0 0.0
  %88 = vmatprep.subr.mxu0 0.0
  %89 = vmatpush1.msra.mxu0 0.0
  %90 = vmatprep.subr.mxu0 0.0
  %91 = vmatpush1.msra.mxu0 0.0
  %92 = vmatprep.subr.mxu0 0.0
  %93 = vmatpush1.msra.mxu0 0.0
  %94 = vmatprep.subr.mxu0 0.0
  %95 = vmatpush1.msra.mxu0 0.0
  %96 = vmatprep.subr.mxu0 0.0
  %97 = vmatpush1.msra.mxu0 0.0
  %98 = vmatprep.subr.mxu0 0.0
  %99 = vmatpush1.msra.mxu0 0.0
  %100 = vmatprep.subr.mxu0 0.0
  %101 = vmatpush1.msra.mxu0 0.0
  %102 = vmatprep.subr.mxu0 0.0
  %103 = vmatpush1.msra.mxu0 0.0
  %104 = vmatprep.subr.mxu0 0.0
  %105 = vmatpush1.msra.mxu0 0.0
  %106 = vmatprep.subr.mxu0 0.0
  %107 = vmatpush1.msra.mxu0 0.0
  %108 = vmatprep.subr.mxu0 0.0
  %109 = vmatpush1.msra.mxu0 0.0
  %110 = vmatprep.subr.mxu0 0.0
  %111 = vmatpush1.msra.mxu0 0.0
  %112 = vmatprep.subr.mxu0 0.0
  %113 = vmatpush1.msra.mxu0 0.0
  %114 = vmatprep.mubr.f32.mxu0 0.0
  %115 = vmatmul.mubr.f32.gmra.mrb[0].mxu0 %v26
  %v116 = vpop.f32.mrb[0].mxu0
  %v117 = vadd.f32 %v48, %v116
  %v118 = vpop.f32.mrb[0].mxu0
  %119 = vdwg.mxu0
  %v120 = vmax.f32 %v117, 0.0
  %v121 = vld [vmem:[%s3] sm:$0xff]
  %v122 = vld [vmem:[%s3 + $0x8] sm:$0xff]
  %v123 = vld [vmem:[%s3 + $0x10] sm:$0xff]
  %v124 = vld [vmem:[%s3 + $0x18] sm:$0xff]
  %v125 = vld [vmem:[%s3 + $0x20] sm:$0xff]
  %v126 = vld [vmem:[%s3 + $0x28] sm:$0xff]
  %v127 = vld [vmem:[%s3 + $0x30] sm:$0xff]
  %v128 = vld [vmem:[%s3 + $0x38] sm:$0xff]
  %v129 = vld [vmem:[%s3 + $0x40] sm:$0xff]
  %v130 = vld [vmem:[%s3 + $0x48] sm:$0xff]
  %v131 = vld [vmem:[%s3 + $0x50] sm:$0xff]
  %v132 = vld [vmem:[%s3 + $0x58] sm:$0xff]
  %v133 = vld [vmem:[%s3 + $0x60] sm:$0xff]
  %v134 = vld [vmem:[%s3 + $0x68] sm:$0xff]
  %v135 = vld [vmem:[%s3 + $0x70] sm:$0xff]
  %v136 = vld [vmem:[%s3 + $0x78] sm:$0xff]
  %v137 = vld [vmem:[%s4] sm:$0x1]
  %v139 = vlaneseq
  %v140 = vshrl.u32 %v139, 7
  %v141 = vsub.s32 0, %v140
  %v142 = vrot.slane %v137, %v141
  %144 = vmatprep.subr.mxu0 0.0
  %145 = vmatpush1.msra.mxu0 %v121
  %146 = vmatprep.subr.mxu0 0.0
  %147 = vmatpush1.msra.mxu0 %v122
  %148 = vmatprep.subr.mxu0 0.0
  %149 = vmatpush1.msra.mxu0 %v123
  %150 = vmatprep.subr.mxu0 0.0
  %151 = vmatpush1.msra.mxu0 %v124
  %152 = vmatprep.subr.mxu0 0.0
  %153 = vmatpush1.msra.mxu0 %v125
  %154 = vmatprep.subr.mxu0 0.0
  %155 = vmatpush1.msra.mxu0 %v126
  %156 = vmatprep.subr.mxu0 0.0
  %157 = vmatpush1.msra.mxu0 %v127
  %158 = vmatprep.subr.mxu0 0.0
  %159 = vmatpush1.msra.mxu0 %v128
  %160 = vmatprep.subr.mxu0 0.0
  %161 = vmatpush1.msra.mxu0 %v129
  %162 = vmatprep.subr.mxu0 0.0
  %163 = vmatpush1.msra.mxu0 %v130
  %164 = vmatprep.subr.mxu0 0.0
  %165 = vmatpush1.msra.mxu0 %v131
  %166 = vmatprep.subr.mxu0 0.0
  %167 = vmatpush1.msra.mxu0 %v132
  %168 = vmatprep.subr.mxu0 0.0
  %169 = vmatpush1.msra.mxu0 %v133
  %170 = vmatprep.subr.mxu0 0.0
  %171 = vmatpush1.msra.mxu0 %v134
  %172 = vmatprep.subr.mxu0 0.0
  %173 = vmatpush1.msra.mxu0 %v135
  %174 = vmatprep.subr.mxu0 0.0
  %175 = vmatpush1.msra.mxu0 %v136
  %176 = vmatprep.subr.mxu0 0.0
  %177 = vmatpush1.msra.mxu0 0.0
  %178 = vmatprep.subr.mxu0 0.0
  %179 = vmatpush1.msra.mxu0 0.0
  %180 = vmatprep.subr.mxu0 0.0
  %181 = vmatpush1.msra.mxu0 0.0
  %182 = vmatprep.subr.mxu0 0.0
  %183 = vmatpush1.msra.mxu0 0.0
  %184 = vmatprep.subr.mxu0 0.0
  %185 = vmatpush1.msra.mxu0 0.0
  %186 = vmatprep.subr.mxu0 0.0
  %187 = vmatpush1.msra.mxu0 0.0
  %188 = vmatprep.subr.mxu0 0.0
  %189 = vmatpush1.msra.mxu0 0.0
  %190 = vmatprep.subr.mxu0 0.0
  %191 = vmatpush1.msra.mxu0 0.0
  %192 = vmatprep.subr.mxu0 0.0
  %193 = vmatpush1.msra.mxu0 0.0
  %194 = vmatprep.subr.mxu0 0.0
  %195 = vmatpush1.msra.mxu0 0.0
  %196 = vmatprep.subr.mxu0 0.0
  %197 = vmatpush1.msra.mxu0 0.0
  %198 = vmatprep.subr.mxu0 0.0
  %199 = vmatpush1.msra.mxu0 0.0
  %200 = vmatprep.subr.mxu0 0.0
  %201 = vmatpush1.msra.mxu0 0.0
  %202 = vmatprep.subr.mxu0 0.0
  %203 = vmatpush1.msra.mxu0 0.0
  %204 = vmatprep.subr.mxu0 0.0
  %205 = vmatpush1.msra.mxu0 0.0
  %206 = vmatprep.subr.mxu0 0.0
  %207 = vmatpush1.msra.mxu0 0.0
  %208 = vmatprep.mubr.f32.mxu0 0.0
  %209 = vmatmul.mubr.f32.gmra.mrb[0].mxu0 %v120
  %v210 = vpop.f32.mrb[0].mxu0
  %v211 = vadd.f32 %v142, %v210
  %v212 = vpop.f32.mrb[0].mxu0
  %213 = vdwg.mxu0
  %v214 = vadd.f32 %v120, %v211
  %v215 = vmax.f32 %v214, 0.0
  %v216 = vld [vmem:[%s5] sm:$0xff]
  %v217 = vld [vmem:[%s5 + $0x8] sm:$0xff]
  %v218 = vld [vmem:[%s5 + $0x10] sm:$0xff]
  %v219 = vld [vmem:[%s5 + $0x18] sm:$0xff]
  %v220 = vld [vmem:[%s5 + $0x20] sm:$0xff]
  %v221 = vld [vmem:[%s5 + $0x28] sm:$0xff]
  %v222 = vld [vmem:[%s5 + $0x30] sm:$0xff]
  %v223 = vld [vmem:[%s5 + $0x38] sm:$0xff]
  %v224 = vld [vmem:[%s5 + $0x40] sm:$0xff]
  %v225 = vld [vmem:[%s5 + $0x48] sm:$0xff]
  %v226 = vld [vmem:[%s5 + $0x50] sm:$0xff]
  %v227 = vld [vmem:[%s5 + $0x58] sm:$0xff]
  %v228 = vld [vmem:[%s5 + $0x60] sm:$0xff]
  %v229 = vld [vmem:[%s5 + $0x68] sm:$0xff]
  %v230 = vld [vmem:[%s5 + $0x70] sm:$0xff]
  %v231 = vld [vmem:[%s5 + $0x78] sm:$0xff]
  %v232 = vld [vmem:[%s6] sm:$0x1]
  %v234 = vlaneseq
  %v235 = vshrl.u32 %v234, 7
  %v236 = vsub.s32 0, %v235
  %v237 = vrot.slane %v232, %v236
  %239 = vmatprep.subr.mxu0 0.0
  %240 = vmatpush1.msra.mxu0 %v216
  %241 = vmatprep.subr.mxu0 0.0
  %242 = vmatpush1.msra.mxu0 %v217
  %243 = vmatprep.subr.mxu0 0.0
  %244 = vmatpush1.msra.mxu0 %v218
  %245 = vmatprep.subr.mxu0 0.0
  %246 = vmatpush1.msra.mxu0 %v219
  %247 = vmatprep.subr.mxu0 0.0
  %248 = vmatpush1.msra.mxu0 %v220
  %249 = vmatprep.subr.mxu0 0.0
  %250 = vmatpush1.msra.mxu0 %v221
  %251 = vmatprep.subr.mxu0 0.0
  %252 = vmatpush1.msra.mxu0 %v222
  %253 = vmatprep.subr.mxu0 0.0
  %254 = vmatpush1.msra.mxu0 %v223
  %255 = vmatprep.subr.mxu0 0.0
  %256 = vmatpush1.msra.mxu0 %v224
  %257 = vmatprep.subr.mxu0 0.0
  %258 = vmatpush1.msra.mxu0 %v225
  %259 = vmatprep.subr.mxu0 0.0
  %260 = vmatpush1.msra.mxu0 %v226
  %261 = vmatprep.subr.mxu0 0.0
  %262 = vmatpush1.msra.mxu0 %v227
  %263 = vmatprep.subr.mxu0 0.0
  %264 = vmatpush1.msra.mxu0 %v228
  %265 = vmatprep.subr.mxu0 0.0
  %266 = vmatpush1.msra.mxu0 %v229
  %267 = vmatprep.subr.mxu0 0.0
  %268 = vmatpush1.msra.mxu0 %v230
  %269 = vmatprep.subr.mxu0 0.0
  %270 = vmatpush1.msra.mxu0 %v231
  %271 = vmatprep.subr.mxu0 0.0
  %272 = vmatpush1.msra.mxu0 0.0
  %273 = vmatprep.subr.mxu0 0.0
  %274 = vmatpush1.msra.mxu0 0.0
  %275 = vmatprep.subr.mxu0 0.0
  %276 = vmatpush1.msra.mxu0 0.0
  %277 = vmatprep.subr.mxu0 0.0
  %278 = vmatpush1.msra.mxu0 0.0
  %279 = vmatprep.subr.mxu0 0.0
  %280 = vmatpush1.msra.mxu0 0.0
  %281 = vmatprep.subr.mxu0 0.0
  %282 = vmatpush1.msra.mxu0 0.0
  %283 = vmatprep.subr.mxu0 0.0
  %284 = vmatpush1.msra.mxu0 0.0
  %285 = vmatprep.subr.mxu0 0.0
  %286 = vmatpush1.msra.mxu0 0.0
  %287 = vmatprep.subr.mxu0 0.0
  %288 = vmatpush1.msra.mxu0 0.0
  %289 = vmatprep.subr.mxu0 0.0
  %290 = vmatpush1.msra.mxu0 0.0
  %291 = vmatprep.subr.mxu0 0.0
  %292 = vmatpush1.msra.mxu0 0.0
  %293 = vmatprep.subr.mxu0 0.0
  %294 = vmatpush1.msra.mxu0 0.0
  %295 = vmatprep.subr.mxu0 0.0
  %296 = vmatpush1.msra.mxu0 0.0
  %297 = vmatprep.subr.mxu0 0.0
  %298 = vmatpush1.msra.mxu0 0.0
  %299 = vmatprep.subr.mxu0 0.0
  %300 = vmatpush1.msra.mxu0 0.0
  %301 = vmatprep.subr.mxu0 0.0
  %302 = vmatpush1.msra.mxu0 0.0
  %303 = vmatprep.mubr.f32.mxu0 0.0
  %304 = vmatmul.mubr.f32.gmra.mrb[0].mxu0 %v215
  %v305 = vpop.f32.mrb[0].mxu0
  %v306 = vadd.f32 %v237, %v305
  %v307 = vpop.f32.mrb[0].mxu0
  %308 = vdwg.mxu0
  %309 = vst [vmem:[%s7] sm:$0xff] %v306
  // Predicated region
  $region30: #{residual_mlp_forward.1} parent=0 // pred_check
    _
  $region31: #{residual_mlp_forward.1} parent=0 // pred_check_branch
    %311 = sbr.rel (0) target = $region33
  $region32: #{residual_mlp_forward.1} parent=0 // pred_region
    _
  $region33: #{residual_mlp_forward.1} parent=0 // pred_fallthru
    _
  // Predicated region
  $region34: #{residual_mlp_forward.1} parent=0 // pred_check
    _
  $region35: #{residual_mlp_forward.1} parent=0 // pred_check_branch
    %313 = sbr.rel (0) target = $region37
  $region36: #{residual_mlp_forward.1} parent=0 // pred_region
    _
  $region37: #{residual_mlp_forward.1} parent=0 // pred_fallthru
    _

</llo_original>
